<compile_context>
chip_gen: v7x
topology: tpu7x:2x2x1
jax: 0.10.0
libtpu: 0.0.40
codegen_flags: <defaults>
</compile_context>

<pallas_src>
import functools

import jax
import jax.numpy as jnp
from jax import lax
from jax.experimental import pallas as pl
from jax.experimental.pallas import tpu as pltpu


_CONTRACT_DIM0 = (((0,), (0,)), ((), ()))  # contract axis 0 of both operands


def _cdiv(a, b):
    return -(-a // b)


def _vicreg_partial_kernel(h1_ref, h2_ref,
                           gram1_out, gram2_out, sum1_out, sum2_out, ssd_out,
                           gram1, gram2, sum1, sum2, ssd,
                           *, n, tn, tiles_per_core, need_mask):
    i = pl.program_id(1)

    @pl.when(i == 0)
    def _init():
        gram1[...] = jnp.zeros_like(gram1)
        gram2[...] = jnp.zeros_like(gram2)
        sum1[...] = jnp.zeros_like(sum1)
        sum2[...] = jnp.zeros_like(sum2)
        ssd[...] = jnp.zeros_like(ssd)

    h1_nat = h1_ref[...]                    # (tn, D) native dtype tile
    h2_nat = h2_ref[...]

    if need_mask:
        c = pl.program_id(0)
        tile_start = (c * tiles_per_core + i) * tn

        def _mask(a, b):
            # Edge blocks only DMA the in-bounds rows; zero the stale tail rows.
            row = lax.broadcasted_iota(jnp.int32, (a.shape[0], 1), 0) + tile_start
            valid = row < n
            return (jnp.where(valid, a, jnp.zeros_like(a)),
                    jnp.where(valid, b, jnp.zeros_like(b)))

        # Only the ragged tail (or a fully-empty) tile pays the masking cost.
        h1_nat, h2_nat = lax.cond(tile_start + tn > n, _mask,
                                  lambda a, b: (a, b), h1_nat, h2_nat)

    h1 = h1_nat.astype(jnp.float32)         # f32 for VPU statistics
    h2 = h2_nat.astype(jnp.float32)

    # Invariance: per-feature (1, D) accumulation; cross-lane reduce at finalize.
    diff = h1 - h2
    ssd[...] += jnp.sum(diff * diff, axis=0, keepdims=True)
    sum1[...] += jnp.sum(h1, axis=0, keepdims=True)
    sum2[...] += jnp.sum(h2, axis=0, keepdims=True)

    # Gram matrices on the MXU: native dtype operands (bf16 is MXU-native on
    # v6e/v7x), f32 accumulation.  diag(gram) doubles as sum(h^2) per feature.
    gram1[...] += lax.dot_general(h1_nat, h1_nat, _CONTRACT_DIM0,
                                  preferred_element_type=jnp.float32)
    gram2[...] += lax.dot_general(h2_nat, h2_nat, _CONTRACT_DIM0,
                                  preferred_element_type=jnp.float32)

    @pl.when(i == tiles_per_core - 1)
    def _writeback():
        gram1_out[0, :, :] = gram1[...]
        gram2_out[0, :, :] = gram2[...]
        sum1_out[0, :, :] = sum1[...]
        sum2_out[0, :, :] = sum2[...]
        ssd_out[0, :, :] = ssd[...]


@jax.jit
def _vicreg_finalize(gram1_p, gram2_p, sum1_p, sum2_p, ssd_p,
                     n_f, sim_w, var_w, cov_w, eps):
    d = gram1_p.shape[-1]
    d_f = jnp.float32(d)
    denom = n_f - 1.0

    g1 = jnp.sum(gram1_p, axis=0)
    g2 = jnp.sum(gram2_p, axis=0)
    s1 = jnp.sum(sum1_p, axis=(0, 1))
    s2 = jnp.sum(sum2_p, axis=(0, 1))
    ssd = jnp.sum(ssd_p)

    mean1 = s1 / n_f
    mean2 = s2 / n_f

    sim_loss = ssd / (n_f * d_f)

    # diag(gram) == sum(h^2) per feature -> one-pass unbiased variance.
    # NOTE: (sumsq - n*mean^2) cancels when |mean| >> std; fine for the roughly
    # zero-mean embeddings VICReg operates on.
    var1 = (jnp.diagonal(g1) - n_f * mean1 * mean1) / denom
    var2 = (jnp.diagonal(g2) - n_f * mean2 * mean2) / denom
    std1 = jnp.sqrt(var1 + eps)
    std2 = jnp.sqrt(var2 + eps)
    var_loss = (jnp.sum(jnp.maximum(1.0 - std1, 0.0))
                + jnp.sum(jnp.maximum(1.0 - std2, 0.0))) / d_f

    # cov = (h^T h - n * mu mu^T) / (n - 1); explicit off-diagonal mask (runs
    # once, avoids the sum(cov^2) - sum(var^2) cancellation).
    cov1 = (g1 - n_f * jnp.outer(mean1, mean1)) / denom
    cov2 = (g2 - n_f * jnp.outer(mean2, mean2)) / denom
    offdiag = 1.0 - jnp.eye(d, dtype=jnp.float32)
    cov_loss = (jnp.sum((cov1 * offdiag) ** 2)
                + jnp.sum((cov2 * offdiag) ** 2)) / d_f

    return sim_w * sim_loss + var_w * var_loss + cov_w * cov_loss


def vicreg_loss_pallas(h1, h2, sim_weight=25.0, var_weight=25.0,
                       cov_weight=1.0, mean=True, eps=1e-4, node_tile=None):
    assert h1.shape == h2.shape and h1.ndim == 2
    assert h1.dtype == h2.dtype
    n, d = h1.shape
    assert n >= 2, "variance/covariance use an (n-1) divisor; need >= 2 rows"

    itemsize = jnp.dtype(h1.dtype).itemsize
    sublane = {4: 8, 2: 16, 1: 32}.get(itemsize, 8)
    row_bytes = d * itemsize

    # VMEM-budget-driven node tile: ~2 MiB per input block (>=85% of the HBM
    # roofline), rounded to the sublane pack, and to 256 (MXU contraction tile)
    # when large.  Small problems fall back to a single full-N step.
    if node_tile is None:
        tn_cap = max(sublane, (2 << 20) // row_bytes)
    else:
        tn_cap = max(sublane, int(node_tile))
    if tn_cap >= 256:
        tn_cap = (tn_cap // 256) * 256
    else:
        tn_cap = max(sublane, (tn_cap // sublane) * sublane)

    if n <= tn_cap:
        tn, total_tiles = n, 1
    else:
        tn, total_tiles = tn_cap, _cdiv(n, tn_cap)

    # Leading "parallel" axis: splits the node range across the two TensorCores
    # on v7x; a harmless serial loop on single-TC v5e/v6e.
    num_cores = 2 if total_tiles >= 2 else 1
    tiles_per_core = _cdiv(total_tiles, num_cores)
    need_mask = (num_cores * tiles_per_core * tn) != n
    last_tile = total_tiles - 1

    def in_map(c, i):
        # Clamp so no block starts past the end of the array; fully-overhanging
        # tiles load (then fully mask) the last real tile instead.
        return (jnp.minimum(c * tiles_per_core + i, last_tile), 0)

    def out_map(c, i):
        return (c, 0, 0)

    # VMEM budget: double-buffered inputs + f32 intermediates + accumulators.
    in_bytes = 2 * 2 * tn * d * itemsize
    interm_bytes = 4 * tn * d * 4
    acc_bytes = 2 * d * d * 4 + 3 * d * 4
    vmem_limit = int(min(max(in_bytes + interm_bytes + 3 * acc_bytes + (8 << 20),
                             32 << 20), 48 << 20))

    kernel = functools.partial(
        _vicreg_partial_kernel, n=n, tn=tn,
        tiles_per_core=tiles_per_core, need_mask=need_mask)

    f32 = jnp.float32
    gram_shape = jax.ShapeDtypeStruct((num_cores, d, d), f32)
    vec_shape = jax.ShapeDtypeStruct((num_cores, 1, d), f32)
    gram_spec = pl.BlockSpec((1, d, d), out_map)
    vec_spec = pl.BlockSpec((1, 1, d), out_map)

    gram1_p, gram2_p, sum1_p, sum2_p, ssd_p = pl.pallas_call(
        kernel,
        out_shape=(gram_shape, gram_shape, vec_shape, vec_shape, vec_shape),
        grid_spec=pltpu.PrefetchScalarGridSpec(
            num_scalar_prefetch=0,
            grid=(num_cores, tiles_per_core),
            in_specs=[pl.BlockSpec((tn, d), in_map),
                      pl.BlockSpec((tn, d), in_map)],
            out_specs=(gram_spec, gram_spec, vec_spec, vec_spec, vec_spec),
            scratch_shapes=[
                pltpu.VMEM((d, d), f32),   # running sum h1^T h1
                pltpu.VMEM((d, d), f32),   # running sum h2^T h2
                pltpu.VMEM((1, d), f32),   # running sum h1
                pltpu.VMEM((1, d), f32),   # running sum h2
                pltpu.VMEM((1, d), f32),   # running sum (h1-h2)^2 per feature
            ]),
        compiler_params=pltpu.CompilerParams(
            dimension_semantics=("parallel", "arbitrary"),
            vmem_limit_bytes=vmem_limit),
    )(h1, h2)

    # l1 == l2 by symmetry of every term, so (l1 + l2) * 0.5 == l1, and the
    # mean/sum of a scalar is the scalar itself -> `mean` does not change the
    # value (kept for signature parity with the torch module).
    del mean
    return _vicreg_finalize(gram1_p, gram2_p, sum1_p, sum2_p, ssd_p,
                            jnp.float32(n), jnp.float32(sim_weight),
                            jnp.float32(var_weight), jnp.float32(cov_weight),
                            jnp.float32(eps))


def _vicreg_loss_ref(h1, h2, sim_w=25.0, var_w=25.0, cov_w=1.0, eps=1e-4):
    n, d = h1.shape
    sim = jnp.mean((h1 - h2) ** 2)
    std1 = jnp.sqrt(jnp.var(h1, axis=0, ddof=1) + eps)
    std2 = jnp.sqrt(jnp.var(h2, axis=0, ddof=1) + eps)
    var = (jnp.mean(jnp.maximum(1.0 - std1, 0.0))
           + jnp.mean(jnp.maximum(1.0 - std2, 0.0)))
    c1 = h1 - h1.mean(axis=0)
    c2 = h2 - h2.mean(axis=0)
    cov1 = c1.T @ c1 / (n - 1)
    cov2 = c2.T @ c2 / (n - 1)
    mask = 1.0 - jnp.eye(d)
    cov = (jnp.sum((cov1 * mask) ** 2) + jnp.sum((cov2 * mask) ** 2)) / d
    return sim_w * sim + var_w * var + cov_w * cov


if __name__ == "__main__":
    key = jax.random.PRNGKey(0)
    k1, k2, k3, k4 = jax.random.split(key, 4)

    # Primary small shape consistent with the module: (num_nodes, hidden_dim).
    N, D = 16, 32
    h1 = jax.random.normal(k1, (N, D), dtype=jnp.float32)
    h2 = h1 + 0.1 * jax.random.normal(k2, (N, D), dtype=jnp.float32)
    out = vicreg_loss_pallas(h1, h2)
    jax.block_until_ready(out)
    ref = _vicreg_loss_ref(h1, h2)
    assert jnp.allclose(out, ref, rtol=1e-3, atol=1e-3), (out, ref)

    # Multi-tile streaming path: 2-way "core" split, ragged tail masked
    # in-kernel (no wrapper jnp.pad), clamped fully-overhanging tile.
    N2, D2 = 600, 32
    g1 = jax.random.normal(k3, (N2, D2), dtype=jnp.float32)
    g2 = jax.random.normal(k4, (N2, D2), dtype=jnp.float32)
    out2 = vicreg_loss_pallas(g1, g2, node_tile=128)
    jax.block_until_ready(out2)
    ref2 = _vicreg_loss_ref(g1, g2)
    assert jnp.allclose(out2, ref2, rtol=1e-3, atol=1e-3), (out2, ref2)

    # bf16 inputs: MXU-native grams with f32 accumulation, 16-row sublane pack.
    b1 = g1.astype(jnp.bfloat16)
    b2 = g2.astype(jnp.bfloat16)
    out3 = vicreg_loss_pallas(b1, b2, node_tile=160)
    jax.block_until_ready(out3)
    ref3 = _vicreg_loss_ref(b1.astype(jnp.float32), b2.astype(jnp.float32))
    assert jnp.allclose(out3, ref3, rtol=2e-2, atol=2e-2), (out3, ref3)

    print("KERNEL_OK")
</pallas_src>

<mosaic_0001>
module attributes {stable_mosaic.version = 11 : i64} {
  func.func @_vicreg_partial_kernel(%arg0: i32, %arg1: i32, %arg2: memref<16x32xf32, #tpu.memory_space<vmem>>, %arg3: memref<16x32xf32, #tpu.memory_space<vmem>>, %arg4: memref<1x32x32xf32, #tpu.memory_space<vmem>>, %arg5: memref<1x32x32xf32, #tpu.memory_space<vmem>>, %arg6: memref<1x1x32xf32, #tpu.memory_space<vmem>>, %arg7: memref<1x1x32xf32, #tpu.memory_space<vmem>>, %arg8: memref<1x1x32xf32, #tpu.memory_space<vmem>>, %arg9: memref<32x32xf32, #tpu.memory_space<vmem>>, %arg10: memref<32x32xf32, #tpu.memory_space<vmem>>, %arg11: memref<1x32xf32, #tpu.memory_space<vmem>>, %arg12: memref<1x32xf32, #tpu.memory_space<vmem>>, %arg13: memref<1x32xf32, #tpu.memory_space<vmem>>) attributes {dimension_semantics = [#tpu.dimension_semantics<parallel>, #tpu.dimension_semantics<arbitrary>], iteration_bounds = array<i64: 1, 1>, scalar_prefetch = 0 : i64, scratch_operands = 5 : i64, tpu.core_type = #tpu.core_type<tc>, window_params = [{transform_indices = @transform_0, window_bounds = array<i64: 16, 32>}, {transform_indices = @transform_1, window_bounds = array<i64: 16, 32>}, {transform_indices = @transform_2, window_bounds = array<i64: 1, 32, 32>}, {transform_indices = @transform_3, window_bounds = array<i64: 1, 32, 32>}, {transform_indices = @transform_4, window_bounds = array<i64: 1, 1, 32>}, {transform_indices = @transform_5, window_bounds = array<i64: 1, 1, 32>}, {transform_indices = @transform_6, window_bounds = array<i64: 1, 1, 32>}]} {
    %c0_i32 = arith.constant 0 : i32
    %0 = arith.cmpi eq, %arg1, %c0_i32 : i32
    %1 = arith.extui %0 : i1 to i32
    %c0_i32_0 = arith.constant 0 : i32
    %2 = arith.cmpi ne, %1, %c0_i32_0 : i32
    scf.if %2 {
      %cst_30 = arith.constant 0.000000e+00 : f32
      %33 = vector.broadcast %cst_30 : f32 to vector<32x32xf32>
      %c0_31 = arith.constant 0 : index
      %c0_32 = arith.constant 0 : index
      %34 = vector.load %arg9[%c0_31, %c0_32] : memref<32x32xf32, #tpu.memory_space<vmem>>, vector<32x32xf32>
      tpu.vector_store %arg9[%c0_31, %c0_32], %33 {strides = array<i32>} : memref<32x32xf32, #tpu.memory_space<vmem>>, vector<32x32xf32>,
      %cst_33 = arith.constant 0.000000e+00 : f32
      %35 = vector.broadcast %cst_33 : f32 to vector<32x32xf32>
      %c0_34 = arith.constant 0 : index
      %c0_35 = arith.constant 0 : index
      %36 = vector.load %arg10[%c0_34, %c0_35] : memref<32x32xf32, #tpu.memory_space<vmem>>, vector<32x32xf32>
      tpu.vector_store %arg10[%c0_34, %c0_35], %35 {strides = array<i32>} : memref<32x32xf32, #tpu.memory_space<vmem>>, vector<32x32xf32>,
      %cst_36 = arith.constant 0.000000e+00 : f32
      %37 = vector.broadcast %cst_36 : f32 to vector<1x32xf32>
      %c0_37 = arith.constant 0 : index
      %c0_38 = arith.constant 0 : index
      %38 = vector.load %arg11[%c0_37, %c0_38] : memref<1x32xf32, #tpu.memory_space<vmem>>, vector<1x32xf32>
      tpu.vector_store %arg11[%c0_37, %c0_38], %37 {strides = array<i32>} : memref<1x32xf32, #tpu.memory_space<vmem>>, vector<1x32xf32>,
      %cst_39 = arith.constant 0.000000e+00 : f32
      %39 = vector.broadcast %cst_39 : f32 to vector<1x32xf32>
      %c0_40 = arith.constant 0 : index
      %c0_41 = arith.constant 0 : index
      %40 = vector.load %arg12[%c0_40, %c0_41] : memref<1x32xf32, #tpu.memory_space<vmem>>, vector<1x32xf32>
      tpu.vector_store %arg12[%c0_40, %c0_41], %39 {strides = array<i32>} : memref<1x32xf32, #tpu.memory_space<vmem>>, vector<1x32xf32>,
      %cst_42 = arith.constant 0.000000e+00 : f32
      %41 = vector.broadcast %cst_42 : f32 to vector<1x32xf32>
      %c0_43 = arith.constant 0 : index
      %c0_44 = arith.constant 0 : index
      %42 = vector.load %arg13[%c0_43, %c0_44] : memref<1x32xf32, #tpu.memory_space<vmem>>, vector<1x32xf32>
      tpu.vector_store %arg13[%c0_43, %c0_44], %41 {strides = array<i32>} : memref<1x32xf32, #tpu.memory_space<vmem>>, vector<1x32xf32>,
    } else {
    }
    %c0 = arith.constant 0 : index
    %c0_1 = arith.constant 0 : index
    %3 = vector.load %arg2[%c0, %c0_1] : memref<16x32xf32, #tpu.memory_space<vmem>>, vector<16x32xf32>
    %c0_2 = arith.constant 0 : index
    %c0_3 = arith.constant 0 : index
    %4 = vector.load %arg3[%c0_2, %c0_3] : memref<16x32xf32, #tpu.memory_space<vmem>>, vector<16x32xf32>
    %5 = arith.subf %3, %4 : vector<16x32xf32>
    %c0_4 = arith.constant 0 : index
    %c0_5 = arith.constant 0 : index
    %6 = vector.load %arg13[%c0_4, %c0_5] : memref<1x32xf32, #tpu.memory_space<vmem>>, vector<1x32xf32>
    %7 = arith.mulf %5, %5 : vector<16x32xf32>
    %cst = arith.constant dense<0.000000e+00> : vector<32xf32>
    %8 = vector.multi_reduction <add>, %7, %cst [0] : vector<16x32xf32> to vector<32xf32>
    %9 = vector.shape_cast %8 : vector<32xf32> to vector<1x32xf32>
    %10 = arith.addf %6, %9 : vector<1x32xf32>
    %c0_6 = arith.constant 0 : index
    %c0_7 = arith.constant 0 : index
    %11 = vector.load %arg13[%c0_6, %c0_7] : memref<1x32xf32, #tpu.memory_space<vmem>>, vector<1x32xf32>
    tpu.vector_store %arg13[%c0_6, %c0_7], %10 {strides = array<i32>} : memref<1x32xf32, #tpu.memory_space<vmem>>, vector<1x32xf32>,
    %c0_8 = arith.constant 0 : index
    %c0_9 = arith.constant 0 : index
    %12 = vector.load %arg11[%c0_8, %c0_9] : memref<1x32xf32, #tpu.memory_space<vmem>>, vector<1x32xf32>
    %cst_10 = arith.constant dense<0.000000e+00> : vector<32xf32>
    %13 = vector.multi_reduction <add>, %3, %cst_10 [0] : vector<16x32xf32> to vector<32xf32>
    %14 = vector.shape_cast %13 : vector<32xf32> to vector<1x32xf32>
    %15 = arith.addf %12, %14 : vector<1x32xf32>
    %c0_11 = arith.constant 0 : index
    %c0_12 = arith.constant 0 : index
    %16 = vector.load %arg11[%c0_11, %c0_12] : memref<1x32xf32, #tpu.memory_space<vmem>>, vector<1x32xf32>
    tpu.vector_store %arg11[%c0_11, %c0_12], %15 {strides = array<i32>} : memref<1x32xf32, #tpu.memory_space<vmem>>, vector<1x32xf32>,
    %c0_13 = arith.constant 0 : index
    %c0_14 = arith.constant 0 : index
    %17 = vector.load %arg12[%c0_13, %c0_14] : memref<1x32xf32, #tpu.memory_space<vmem>>, vector<1x32xf32>
    %cst_15 = arith.constant dense<0.000000e+00> : vector<32xf32>
    %18 = vector.multi_reduction <add>, %4, %cst_15 [0] : vector<16x32xf32> to vector<32xf32>
    %19 = vector.shape_cast %18 : vector<32xf32> to vector<1x32xf32>
    %20 = arith.addf %17, %19 : vector<1x32xf32>
    %c0_16 = arith.constant 0 : index
    %c0_17 = arith.constant 0 : index
    %21 = vector.load %arg12[%c0_16, %c0_17] : memref<1x32xf32, #tpu.memory_space<vmem>>, vector<1x32xf32>
    tpu.vector_store %arg12[%c0_16, %c0_17], %20 {strides = array<i32>} : memref<1x32xf32, #tpu.memory_space<vmem>>, vector<1x32xf32>,
    %c0_18 = arith.constant 0 : index
    %c0_19 = arith.constant 0 : index
    %22 = vector.load %arg9[%c0_18, %c0_19] : memref<32x32xf32, #tpu.memory_space<vmem>>, vector<32x32xf32>
    %cst_20 = arith.constant dense<0.000000e+00> : vector<32x32xf32>
    %23 = tpu.matmul %3, %3, %cst_20 {dimension_numbers = #tpu.dot_dimension_numbers<[0], [0], [1], [1], [0, 1, 1, 1], [], []>} : vector<16x32xf32>, vector<16x32xf32>, vector<32x32xf32> -> vector<32x32xf32>
    %24 = arith.addf %22, %23 : vector<32x32xf32>
    %c0_21 = arith.constant 0 : index
    %c0_22 = arith.constant 0 : index
    %25 = vector.load %arg9[%c0_21, %c0_22] : memref<32x32xf32, #tpu.memory_space<vmem>>, vector<32x32xf32>
    tpu.vector_store %arg9[%c0_21, %c0_22], %24 {strides = array<i32>} : memref<32x32xf32, #tpu.memory_space<vmem>>, vector<32x32xf32>,
    %c0_23 = arith.constant 0 : index
    %c0_24 = arith.constant 0 : index
    %26 = vector.load %arg10[%c0_23, %c0_24] : memref<32x32xf32, #tpu.memory_space<vmem>>, vector<32x32xf32>
    %cst_25 = arith.constant dense<0.000000e+00> : vector<32x32xf32>
    %27 = tpu.matmul %4, %4, %cst_25 {dimension_numbers = #tpu.dot_dimension_numbers<[0], [0], [1], [1], [0, 1, 1, 1], [], []>} : vector<16x32xf32>, vector<16x32xf32>, vector<32x32xf32> -> vector<32x32xf32>
    %28 = arith.addf %26, %27 : vector<32x32xf32>
    %c0_26 = arith.constant 0 : index
    %c0_27 = arith.constant 0 : index
    %29 = vector.load %arg10[%c0_26, %c0_27] : memref<32x32xf32, #tpu.memory_space<vmem>>, vector<32x32xf32>
    tpu.vector_store %arg10[%c0_26, %c0_27], %28 {strides = array<i32>} : memref<32x32xf32, #tpu.memory_space<vmem>>, vector<32x32xf32>,
    %c0_i32_28 = arith.constant 0 : i32
    %30 = arith.cmpi eq, %arg1, %c0_i32_28 : i32
    %31 = arith.extui %30 : i1 to i32
    %c0_i32_29 = arith.constant 0 : i32
    %32 = arith.cmpi ne, %31, %c0_i32_29 : i32
    scf.if %32 {
      %c0_30 = arith.constant 0 : index
      %c0_31 = arith.constant 0 : index
      %33 = vector.load %arg9[%c0_30, %c0_31] : memref<32x32xf32, #tpu.memory_space<vmem>>, vector<32x32xf32>
      %c0_32 = arith.constant 0 : index
      %c0_33 = arith.constant 0 : index
      %c0_34 = arith.constant 0 : index
      %34 = vector.load %arg4[%c0_32, %c0_33, %c0_34] : memref<1x32x32xf32, #tpu.memory_space<vmem>>, vector<1x32x32xf32>
      %35 = vector.shape_cast %34 : vector<1x32x32xf32> to vector<32x32xf32>
      %36 = vector.shape_cast %33 : vector<32x32xf32> to vector<1x32x32xf32>
      tpu.vector_store %arg4[%c0_32, %c0_33, %c0_34], %36 {strides = array<i32>} : memref<1x32x32xf32, #tpu.memory_space<vmem>>, vector<1x32x32xf32>,
      %c0_35 = arith.constant 0 : index
      %c0_36 = arith.constant 0 : index
      %37 = vector.load %arg10[%c0_35, %c0_36] : memref<32x32xf32, #tpu.memory_space<vmem>>, vector<32x32xf32>
      %c0_37 = arith.constant 0 : index
      %c0_38 = arith.constant 0 : index
      %c0_39 = arith.constant 0 : index
      %38 = vector.load %arg5[%c0_37, %c0_38, %c0_39] : memref<1x32x32xf32, #tpu.memory_space<vmem>>, vector<1x32x32xf32>
      %39 = vector.shape_cast %38 : vector<1x32x32xf32> to vector<32x32xf32>
      %40 = vector.shape_cast %37 : vector<32x32xf32> to vector<1x32x32xf32>
      tpu.vector_store %arg5[%c0_37, %c0_38, %c0_39], %40 {strides = array<i32>} : memref<1x32x32xf32, #tpu.memory_space<vmem>>, vector<1x32x32xf32>,
      %c0_40 = arith.constant 0 : index
      %c0_41 = arith.constant 0 : index
      %41 = vector.load %arg11[%c0_40, %c0_41] : memref<1x32xf32, #tpu.memory_space<vmem>>, vector<1x32xf32>
      %c0_42 = arith.constant 0 : index
      %c0_43 = arith.constant 0 : index
      %c0_44 = arith.constant 0 : index
      %42 = vector.load %arg6[%c0_42, %c0_43, %c0_44] : memref<1x1x32xf32, #tpu.memory_space<vmem>>, vector<1x1x32xf32>
      %43 = vector.shape_cast %42 : vector<1x1x32xf32> to vector<1x32xf32>
      %44 = vector.shape_cast %41 : vector<1x32xf32> to vector<1x1x32xf32>
      tpu.vector_store %arg6[%c0_42, %c0_43, %c0_44], %44 {strides = array<i32>} : memref<1x1x32xf32, #tpu.memory_space<vmem>>, vector<1x1x32xf32>,
      %c0_45 = arith.constant 0 : index
      %c0_46 = arith.constant 0 : index
      %45 = vector.load %arg12[%c0_45, %c0_46] : memref<1x32xf32, #tpu.memory_space<vmem>>, vector<1x32xf32>
      %c0_47 = arith.constant 0 : index
      %c0_48 = arith.constant 0 : index
      %c0_49 = arith.constant 0 : index
      %46 = vector.load %arg7[%c0_47, %c0_48, %c0_49] : memref<1x1x32xf32, #tpu.memory_space<vmem>>, vector<1x1x32xf32>
      %47 = vector.shape_cast %46 : vector<1x1x32xf32> to vector<1x32xf32>
      %48 = vector.shape_cast %45 : vector<1x32xf32> to vector<1x1x32xf32>
      tpu.vector_store %arg7[%c0_47, %c0_48, %c0_49], %48 {strides = array<i32>} : memref<1x1x32xf32, #tpu.memory_space<vmem>>, vector<1x1x32xf32>,
      %c0_50 = arith.constant 0 : index
      %c0_51 = arith.constant 0 : index
      %49 = vector.load %arg13[%c0_50, %c0_51] : memref<1x32xf32, #tpu.memory_space<vmem>>, vector<1x32xf32>
      %c0_52 = arith.constant 0 : index
      %c0_53 = arith.constant 0 : index
      %c0_54 = arith.constant 0 : index
      %50 = vector.load %arg8[%c0_52, %c0_53, %c0_54] : memref<1x1x32xf32, #tpu.memory_space<vmem>>, vector<1x1x32xf32>
      %51 = vector.shape_cast %50 : vector<1x1x32xf32> to vector<1x32xf32>
      %52 = vector.shape_cast %49 : vector<1x32xf32> to vector<1x1x32xf32>
      tpu.vector_store %arg8[%c0_52, %c0_53, %c0_54], %52 {strides = array<i32>} : memref<1x1x32xf32, #tpu.memory_space<vmem>>, vector<1x1x32xf32>,
    } else {
    }
    return
  }
  func.func @transform_0(%arg0: i32, %arg1: i32) -> (i32, i32) {
    %c1_i32 = arith.constant 1 : i32
    %0 = arith.muli %arg0, %c1_i32 : i32
    %1 = arith.addi %0, %arg1 : i32
    %c0_i32 = arith.constant 0 : i32
    %2 = arith.minsi %1, %c0_i32 : i32
    %c0_i32_0 = arith.constant 0 : i32
    %c0_i32_1 = arith.constant 0 : i32
    return %2, %c0_i32_0 : i32, i32
  }
  func.func @transform_1(%arg0: i32, %arg1: i32) -> (i32, i32) {
    %c1_i32 = arith.constant 1 : i32
    %0 = arith.muli %arg0, %c1_i32 : i32
    %1 = arith.addi %0, %arg1 : i32
    %c0_i32 = arith.constant 0 : i32
    %2 = arith.minsi %1, %c0_i32 : i32
    %c0_i32_0 = arith.constant 0 : i32
    %c0_i32_1 = arith.constant 0 : i32
    return %2, %c0_i32_0 : i32, i32
  }
  func.func @transform_2(%arg0: i32, %arg1: i32) -> (i32, i32, i32) {
    %c0_i32 = arith.constant 0 : i32
    %c0_i32_0 = arith.constant 0 : i32
    %c0_i32_1 = arith.constant 0 : i32
    return %arg0, %c0_i32, %c0_i32_0 : i32, i32, i32
  }
  func.func @transform_3(%arg0: i32, %arg1: i32) -> (i32, i32, i32) {
    %c0_i32 = arith.constant 0 : i32
    %c0_i32_0 = arith.constant 0 : i32
    %c0_i32_1 = arith.constant 0 : i32
    return %arg0, %c0_i32, %c0_i32_0 : i32, i32, i32
  }
  func.func @transform_4(%arg0: i32, %arg1: i32) -> (i32, i32, i32) {
    %c0_i32 = arith.constant 0 : i32
    %c0_i32_0 = arith.constant 0 : i32
    %c0_i32_1 = arith.constant 0 : i32
    return %arg0, %c0_i32, %c0_i32_0 : i32, i32, i32
  }
  func.func @transform_5(%arg0: i32, %arg1: i32) -> (i32, i32, i32) {
    %c0_i32 = arith.constant 0 : i32
    %c0_i32_0 = arith.constant 0 : i32
    %c0_i32_1 = arith.constant 0 : i32
    return %arg0, %c0_i32, %c0_i32_0 : i32, i32, i32
  }
  func.func @transform_6(%arg0: i32, %arg1: i32) -> (i32, i32, i32) {
    %c0_i32 = arith.constant 0 : i32
    %c0_i32_0 = arith.constant 0 : i32
    %c0_i32_1 = arith.constant 0 : i32
    return %arg0, %c0_i32, %c0_i32_0 : i32, i32, i32
  }
}

</mosaic_0001>

<llo_original>
// kernel: tpu_custom_call.1
$region0: #{tpu_custom_call.1}
  #allocation0 [shape = 'u32[]', space=smem, size = 0x4, offset = 0x4, fixed_abs, tag = 'smem constant byte address 0x4 - core index']
  #allocation1 [shape = 'u32[144,128]{1,0:T(1,128)}', space=vmem, size = 0x12000, scoped, tag = 'internal scratch']
  #allocation2 [shape = 'f32[32,32]{1,0:T(8,128)}', space=vmem, size = 0x4000, scoped, tag = 'scratch operand']
  #allocation3 [shape = 'f32[32,32]{1,0:T(8,128)}', space=vmem, size = 0x4000, scoped, tag = 'scratch operand']
  #allocation4 [shape = 'f32[1,32]{1,0:T(1,128)}', space=vmem, size = 0x200, scoped, tag = 'scratch operand']
  #allocation5 [shape = 'f32[1,32]{1,0:T(1,128)}', space=vmem, size = 0x200, scoped, tag = 'scratch operand']
  #allocation6 [shape = 'f32[1,32]{1,0:T(1,128)}', space=vmem, size = 0x200, scoped, tag = 'scratch operand']
  %s0 = inlined_call_operand.hbm [shape: f32[16,32], index: 0, kind: input, shape index: {}]
  %s1 = inlined_call_operand.hbm [shape: f32[16,32], index: 1, kind: input, shape index: {}]
  %s2 = inlined_call_operand.hbm [shape: f32[1,32,32], index: 2, kind: output, shape index: {0}]
  %s3 = inlined_call_operand.hbm [shape: f32[1,32,32], index: 3, kind: output, shape index: {1}]
  %s4 = inlined_call_operand.hbm [shape: f32[1,1,32], index: 4, kind: output, shape index: {2}]
  %s5 = inlined_call_operand.hbm [shape: f32[1,1,32], index: 5, kind: output, shape index: {3}]
  %s6 = inlined_call_operand.hbm [shape: f32[1,1,32], index: 6, kind: output, shape index: {4}]
  %7 = xla_tuple %s2, %s3, %s4, %s5, %s6
  %s8 = sld [smem:[#allocation0]]
  $region66: #{tpu_custom_call.1} parent=0
    _
  %s10 = ssub.s32 1, %s8
  %s11 = scalar_select 0, %s10, %s8
  $region1: #{tpu_custom_call.1} parent=0
    #allocation7 [shape = 'u8[8192]{0}', space=vmem, size = 0x2000, scoped, tag = 'input window, operand 0, single buffered']
    #allocation8 [shape = 's32[1]{0}', space=sflag, size = 0x4, scoped, tag = 'scoped memory for tpu_custom_call.1']
    #allocation9 [shape = 's32[1]{0}', space=sflag, size = 0x4, scoped, tag = 'scoped memory for tpu_custom_call.1']
    #allocation10 [shape = 'u8[8192]{0}', space=vmem, size = 0x2000, scoped, tag = 'input window, operand 1, single buffered']
    #allocation11 [shape = 's32[1]{0}', space=sflag, size = 0x4, scoped, tag = 'scoped memory for tpu_custom_call.1']
    #allocation12 [shape = 'u8[16384]{0}', space=vmem, size = 0x4000, scoped, tag = 'output window, operand 0, single buffered']
    #allocation13 [shape = 'u8[16384]{0}', space=vmem, size = 0x4000, scoped, tag = 'output window, operand 1, single buffered']
    #allocation14 [shape = 's32[1]{0}', space=sflag, size = 0x4, scoped, tag = 'scoped memory for tpu_custom_call.1']
    #allocation15 [shape = 'u8[512]{0}', space=vmem, size = 0x400, scoped, tag = 'output window, operand 2, single buffered']
    #allocation16 [shape = 'u8[512]{0}', space=vmem, size = 0x400, scoped, tag = 'output window, operand 3, single buffered']
    #allocation17 [shape = 's32[1]{0}', space=sflag, size = 0x4, scoped, tag = 'scoped memory for tpu_custom_call.1']
    #allocation18 [shape = 'u8[512]{0}', space=vmem, size = 0x400, scoped, tag = 'output window, operand 4, single buffered']
    %12 = vsyncpa [#allocation8], 0
    %13 = vsyncpa [#allocation11], 0
    %14 = vsyncpa [#allocation9], 0
    %15 = vsyncpa [#allocation14], 0
    %16 = vsyncpa [#allocation17], 0
    // Predicated region
    $region2: #{tpu_custom_call.1} parent=1 // pred_check
      _
    $region3: #{tpu_custom_call.1} parent=1 // pred_check_branch
      %18 = sbr.rel (0) target = $region5
    $region4: #{tpu_custom_call.1} parent=1 // pred_region
      %s19 = sadd.s32 0, 0
      %p20 = scmp.lt.s32.totalorder %s19, 0
      %s21 = scalar_select %p20, %s19, 0
      %s22 = smul.u32 2, %s21
      %s24 = ssub.s32 256, 256
      %25 = vsyncadd [#allocation8], %s24
      %s26 = smul.addr %s22, 128
      %s27 = scalar_lea.hbm %s0, %s26
      %s28 = sshll.u32 [#allocation7], 4
      %s29 = int_to_ptr.vmem [resolvable:$true] %s28
      %34 = dma.hbm_to_vmem [thread:$0]  %s27, 256, %s29, [#allocation8], 128, 128, 8
    $region5: #{tpu_custom_call.1} parent=1 // pred_fallthru
      _
    // Predicated region
    $region6: #{tpu_custom_call.1} parent=1 // pred_check
      _
    $region7: #{tpu_custom_call.1} parent=1 // pred_check_branch
      %36 = sbr.rel (0) target = $region9
    $region8: #{tpu_custom_call.1} parent=1 // pred_region
      %s37 = sadd.s32 0, 0
      %p38 = scmp.lt.s32.totalorder %s37, 0
      %s39 = scalar_select %p38, %s37, 0
      %s40 = smul.u32 2, %s39
      %s42 = ssub.s32 256, 256
      %43 = vsyncadd [#allocation11], %s42
      %s44 = smul.addr %s40, 128
      %s45 = scalar_lea.hbm %s1, %s44
      %s46 = sshll.u32 [#allocation10], 4
      %s47 = int_to_ptr.vmem [resolvable:$true] %s46
      %52 = dma.hbm_to_vmem [thread:$0]  %s45, 256, %s47, [#allocation11], 128, 128, 8
    $region9: #{tpu_custom_call.1} parent=1 // pred_fallthru
      _
    // Predicated region
    $region10: #{tpu_custom_call.1} parent=1 // pred_check
      _
    $region11: #{tpu_custom_call.1} parent=1 // pred_check_branch
      %54 = sbr.rel (0) target = $region13
    $region12: #{tpu_custom_call.1} parent=1 // pred_region
      %55 = dma.done [#allocation8], 256
    $region13: #{tpu_custom_call.1} parent=1 // pred_fallthru
      _
    // Predicated region
    $region14: #{tpu_custom_call.1} parent=1 // pred_check
      _
    $region15: #{tpu_custom_call.1} parent=1 // pred_check_branch
      %57 = sbr.rel (0) target = $region17
    $region16: #{tpu_custom_call.1} parent=1 // pred_region
      %58 = dma.done [#allocation11], 256
    $region17: #{tpu_custom_call.1} parent=1 // pred_fallthru
      _
    %s59 = sadd.s32 0, 0
    %p60 = scmp.lt.s32.totalorder %s59, 0
    %s61 = scalar_select %p60, %s59, 0
    %s62 = smul.u32 2, %s61
    %s63 = sadd.s32 0, 0
    %p64 = scmp.lt.s32.totalorder %s63, 0
    %s65 = scalar_select %p64, %s63, 0
    %s66 = smul.u32 2, %s65
    %p67 = scmp.eq.s32.totalorder 0, 0
    // Predicated region
    $region18: #{tpu_custom_call.1} parent=1 // pred_check
      %p68 = pneg %p67
    $region19: #{tpu_custom_call.1} parent=1 // pred_check_branch
      %70 = sbr.rel (%p68) target = $region21
    $region20: #{tpu_custom_call.1} parent=1 // pred_region
      %vm71 = vcmask 261120
      %72 = vst.msk [vmem:[#allocation2] sm:$0xff] %vm71, 0.0
      %73 = vst.msk [vmem:[#allocation2 + $0x8] sm:$0xff] %vm71, 0.0
      %74 = vst.msk [vmem:[#allocation2 + $0x10] sm:$0xff] %vm71, 0.0
      %75 = vst.msk [vmem:[#allocation2 + $0x18] sm:$0xff] %vm71, 0.0
      %76 = vst.msk [vmem:[#allocation3] sm:$0xff] %vm71, 0.0
      %77 = vst.msk [vmem:[#allocation3 + $0x8] sm:$0xff] %vm71, 0.0
      %78 = vst.msk [vmem:[#allocation3 + $0x10] sm:$0xff] %vm71, 0.0
      %79 = vst.msk [vmem:[#allocation3 + $0x18] sm:$0xff] %vm71, 0.0
      %vm80 = vcmask 253952
      %81 = vst.msk [vmem:[#allocation4] sm:$0x1] %vm80, 0.0
      %82 = vst.msk [vmem:[#allocation5] sm:$0x1] %vm80, 0.0
      %83 = vst.msk [vmem:[#allocation6] sm:$0x1] %vm80, 0.0
    $region21: #{tpu_custom_call.1} parent=1 // pred_fallthru
      _
    %v84 = vld [vmem:[#allocation7] sm:$0xff]
    %v85 = vld [vmem:[#allocation7 + $0x8] sm:$0xff]
    %v86 = vld [vmem:[#allocation10] sm:$0xff]
    %v87 = vld [vmem:[#allocation10 + $0x8] sm:$0xff]
    %v88 = vsub.f32 %v84, %v86
    %v89 = vsub.f32 %v85, %v87
    %v90 = vld [vmem:[#allocation6] sm:$0x1]
    %v91 = vmul.f32 %v88, %v88
    %v92 = vmul.f32 %v89, %v89
    %vm93 = vcmask 261120
    %v94 = vsel %vm93, %v91, 0.0
    %v95 = vsel %vm93, %v92, 0.0
    %v96 = vadd.f32 %v94, %v95
    %v97 = vrot.slane %v96, 4
    %v98 = vadd.f32 %v96, %v97
    %v99 = vrot.slane %v98, 2
    %v100 = vadd.f32 %v98, %v99
    %v101 = vrot.slane %v100, 1
    %v102 = vadd.f32 %v100, %v101
    %v103 = vadd.f32 %v90, %v102
    %vm104 = vcmask 253952
    %105 = vst.msk [vmem:[#allocation6] sm:$0x1] %vm104, %v103
    %v106 = vld [vmem:[#allocation4] sm:$0x1]
    %v107 = vsel %vm93, %v84, 0.0
    %v108 = vsel %vm93, %v85, 0.0
    %v109 = vadd.f32 %v107, %v108
    %v110 = vrot.slane %v109, 4
    %v111 = vadd.f32 %v109, %v110
    %v112 = vrot.slane %v111, 2
    %v113 = vadd.f32 %v111, %v112
    %v114 = vrot.slane %v113, 1
    %v115 = vadd.f32 %v113, %v114
    %v116 = vadd.f32 %v106, %v115
    %117 = vst.msk [vmem:[#allocation4] sm:$0x1] %vm104, %v116
    %v118 = vld [vmem:[#allocation5] sm:$0x1]
    %v119 = vsel %vm93, %v86, 0.0
    %v120 = vsel %vm93, %v87, 0.0
    %v121 = vadd.f32 %v119, %v120
    %v122 = vrot.slane %v121, 4
    %v123 = vadd.f32 %v121, %v122
    %v124 = vrot.slane %v123, 2
    %v125 = vadd.f32 %v123, %v124
    %v126 = vrot.slane %v125, 1
    %v127 = vadd.f32 %v125, %v126
    %v128 = vadd.f32 %v118, %v127
    %129 = vst.msk [vmem:[#allocation5] sm:$0x1] %vm104, %v128
    %v130 = vld [vmem:[#allocation2] sm:$0xff]
    %v131 = vld [vmem:[#allocation2 + $0x8] sm:$0xff]
    %v132 = vld [vmem:[#allocation2 + $0x10] sm:$0xff]
    %v133 = vld [vmem:[#allocation2 + $0x18] sm:$0xff]
    %134 = vxpose.xlu0.b32.start [1/16] %v84, 128
    %135 = vxpose.xlu0.b32.cont [2/16] %v85, 128
    %136 = vxpose.xlu0.b32.cont [3/16] 0.0, 128
    %137 = vxpose.xlu0.b32.cont [4/16] 0.0, 128
    %138 = vxpose.xlu0.b32.cont [5/16] 0.0, 128
    %139 = vxpose.xlu0.b32.cont [6/16] 0.0, 128
    %140 = vxpose.xlu0.b32.cont [7/16] 0.0, 128
    %141 = vxpose.xlu0.b32.cont [8/16] 0.0, 128
    %142 = vxpose.xlu0.b32.cont [9/16] 0.0, 128
    %143 = vxpose.xlu0.b32.cont [10/16] 0.0, 128
    %144 = vxpose.xlu0.b32.cont [11/16] 0.0, 128
    %145 = vxpose.xlu0.b32.cont [12/16] 0.0, 128
    %146 = vxpose.xlu0.b32.cont [13/16] 0.0, 128
    %147 = vxpose.xlu0.b32.cont [14/16] 0.0, 128
    %148 = vxpose.xlu0.b32.cont [15/16] 0.0, 128
    %149 = vxpose.xlu0.b32.end [16/16] 0.0, 128
    %v150 = vpop.trf.xlu0
    %v151 = vpop.trf.xlu0
    %v152 = vpop.trf.xlu0
    %v153 = vpop.trf.xlu0
    %v154 = vpop.trf.xlu0
    %v155 = vpop.trf.xlu0
    %v156 = vpop.trf.xlu0
    %v157 = vpop.trf.xlu0
    %v158 = vpop.trf.xlu0
    %v159 = vpop.trf.xlu0
    %v160 = vpop.trf.xlu0
    %v161 = vpop.trf.xlu0
    %v162 = vpop.trf.xlu0
    %v163 = vpop.trf.xlu0
    %v164 = vpop.trf.xlu0
    %v165 = vpop.trf.xlu0
    %vm166 = vcmask 130048
    %v168 = vsel %vm166, %v150, 0
    %v171 = vsel %vm166, %v151, 0
    %v174 = vsel %vm166, %v152, 0
    %v177 = vsel %vm166, %v153, 0
    %179 = vmatprep.subr.mxu0 0.0
    %180 = vmatpush1.msra.mxu0 %v84
    %181 = vmatprep.subr.mxu0 0.0
    %182 = vmatpush1.msra.mxu0 %v85
    %183 = vmatprep.subr.mxu0 0.0
    %184 = vmatpush1.msra.mxu0 0.0
    %185 = vmatprep.subr.mxu0 0.0
    %186 = vmatpush1.msra.mxu0 0.0
    %187 = vmatprep.subr.mxu0 0.0
    %188 = vmatpush1.msra.mxu0 0.0
    %189 = vmatprep.subr.mxu0 0.0
    %190 = vmatpush1.msra.mxu0 0.0
    %191 = vmatprep.subr.mxu0 0.0
    %192 = vmatpush1.msra.mxu0 0.0
    %193 = vmatprep.subr.mxu0 0.0
    %194 = vmatpush1.msra.mxu0 0.0
    %195 = vmatprep.subr.mxu0 0.0
    %196 = vmatpush1.msra.mxu0 0.0
    %197 = vmatprep.subr.mxu0 0.0
    %198 = vmatpush1.msra.mxu0 0.0
    %199 = vmatprep.subr.mxu0 0.0
    %200 = vmatpush1.msra.mxu0 0.0
    %201 = vmatprep.subr.mxu0 0.0
    %202 = vmatpush1.msra.mxu0 0.0
    %203 = vmatprep.subr.mxu0 0.0
    %204 = vmatpush1.msra.mxu0 0.0
    %205 = vmatprep.subr.mxu0 0.0
    %206 = vmatpush1.msra.mxu0 0.0
    %207 = vmatprep.subr.mxu0 0.0
    %208 = vmatpush1.msra.mxu0 0.0
    %209 = vmatprep.subr.mxu0 0.0
    %210 = vmatpush1.msra.mxu0 0.0
    %211 = vmatprep.subr.mxu0 0.0
    %212 = vmatpush1.msra.mxu0 0.0
    %213 = vmatprep.subr.mxu0 0.0
    %214 = vmatpush1.msra.mxu0 0.0
    %215 = vmatprep.subr.mxu0 0.0
    %216 = vmatpush1.msra.mxu0 0.0
    %217 = vmatprep.subr.mxu0 0.0
    %218 = vmatpush1.msra.mxu0 0.0
    %219 = vmatprep.subr.mxu0 0.0
    %220 = vmatpush1.msra.mxu0 0.0
    %221 = vmatprep.subr.mxu0 0.0
    %222 = vmatpush1.msra.mxu0 0.0
    %223 = vmatprep.subr.mxu0 0.0
    %224 = vmatpush1.msra.mxu0 0.0
    %225 = vmatprep.subr.mxu0 0.0
    %226 = vmatpush1.msra.mxu0 0.0
    %227 = vmatprep.subr.mxu0 0.0
    %228 = vmatpush1.msra.mxu0 0.0
    %229 = vmatprep.subr.mxu0 0.0
    %230 = vmatpush1.msra.mxu0 0.0
    %231 = vmatprep.subr.mxu0 0.0
    %232 = vmatpush1.msra.mxu0 0.0
    %233 = vmatprep.subr.mxu0 0.0
    %234 = vmatpush1.msra.mxu0 0.0
    %235 = vmatprep.subr.mxu0 0.0
    %236 = vmatpush1.msra.mxu0 0.0
    %237 = vmatprep.subr.mxu0 0.0
    %238 = vmatpush1.msra.mxu0 0.0
    %239 = vmatprep.subr.mxu0 0.0
    %240 = vmatpush1.msra.mxu0 0.0
    %241 = vmatprep.subr.mxu0 0.0
    %242 = vmatpush1.msra.mxu0 0.0
    %243 = vmatprep.mubr.f32.mxu0 0.0
    %244 = vmatmul.mubr.f32.gmra.mrb[0].mxu0 %v168
    %v245 = vpop.f32.mrb[0].mxu0
    %v246 = vadd.f32 0.0, %v245
    %v247 = vpop.f32.mrb[0].mxu0
    %248 = vmatprep.mubr.f32.mxu0 0.0
    %249 = vmatmul.mubr.f32.gmra.mrb[0].mxu0 %v171
    %v250 = vpop.f32.mrb[0].mxu0
    %v251 = vadd.f32 0.0, %v250
    %v252 = vpop.f32.mrb[0].mxu0
    %253 = vmatprep.mubr.f32.mxu0 0.0
    %254 = vmatmul.mubr.f32.gmra.mrb[0].mxu0 %v174
    %v255 = vpop.f32.mrb[0].mxu0
    %v256 = vadd.f32 0.0, %v255
    %v257 = vpop.f32.mrb[0].mxu0
    %258 = vmatprep.mubr.f32.mxu0 0.0
    %259 = vmatmul.mubr.f32.gmra.mrb[0].mxu0 %v177
    %v260 = vpop.f32.mrb[0].mxu0
    %v261 = vadd.f32 0.0, %v260
    %v262 = vpop.f32.mrb[0].mxu0
    %263 = vdwg.mxu0
    %v264 = vadd.f32 %v130, %v246
    %v265 = vadd.f32 %v131, %v251
    %v266 = vadd.f32 %v132, %v256
    %v267 = vadd.f32 %v133, %v261
    %268 = vst.msk [vmem:[#allocation2] sm:$0xff] %vm93, %v264
    %269 = vst.msk [vmem:[#allocation2 + $0x8] sm:$0xff] %vm93, %v265
    %270 = vst.msk [vmem:[#allocation2 + $0x10] sm:$0xff] %vm93, %v266
    %271 = vst.msk [vmem:[#allocation2 + $0x18] sm:$0xff] %vm93, %v267
    %v272 = vld [vmem:[#allocation3] sm:$0xff]
    %v273 = vld [vmem:[#allocation3 + $0x8] sm:$0xff]
    %v274 = vld [vmem:[#allocation3 + $0x10] sm:$0xff]
    %v275 = vld [vmem:[#allocation3 + $0x18] sm:$0xff]
    %276 = vxpose.xlu0.b32.start [1/16] %v86, 128
    %277 = vxpose.xlu0.b32.cont [2/16] %v87, 128
    %278 = vxpose.xlu0.b32.cont [3/16] 0.0, 128
    %279 = vxpose.xlu0.b32.cont [4/16] 0.0, 128
    %280 = vxpose.xlu0.b32.cont [5/16] 0.0, 128
    %281 = vxpose.xlu0.b32.cont [6/16] 0.0, 128
    %282 = vxpose.xlu0.b32.cont [7/16] 0.0, 128
    %283 = vxpose.xlu0.b32.cont [8/16] 0.0, 128
    %284 = vxpose.xlu0.b32.cont [9/16] 0.0, 128
    %285 = vxpose.xlu0.b32.cont [10/16] 0.0, 128
    %286 = vxpose.xlu0.b32.cont [11/16] 0.0, 128
    %287 = vxpose.xlu0.b32.cont [12/16] 0.0, 128
    %288 = vxpose.xlu0.b32.cont [13/16] 0.0, 128
    %289 = vxpose.xlu0.b32.cont [14/16] 0.0, 128
    %290 = vxpose.xlu0.b32.cont [15/16] 0.0, 128
    %291 = vxpose.xlu0.b32.end [16/16] 0.0, 128
    %v292 = vpop.trf.xlu0
    %v293 = vpop.trf.xlu0
    %v294 = vpop.trf.xlu0
    %v295 = vpop.trf.xlu0
    %v296 = vpop.trf.xlu0
    %v297 = vpop.trf.xlu0
    %v298 = vpop.trf.xlu0
    %v299 = vpop.trf.xlu0
    %v300 = vpop.trf.xlu0
    %v301 = vpop.trf.xlu0
    %v302 = vpop.trf.xlu0
    %v303 = vpop.trf.xlu0
    %v304 = vpop.trf.xlu0
    %v305 = vpop.trf.xlu0
    %v306 = vpop.trf.xlu0
    %v307 = vpop.trf.xlu0
    %v309 = vsel %vm166, %v292, 0
    %v312 = vsel %vm166, %v293, 0
    %v315 = vsel %vm166, %v294, 0
    %v318 = vsel %vm166, %v295, 0
    %320 = vmatprep.subr.mxu0 0.0
    %321 = vmatpush1.msra.mxu0 %v86
    %322 = vmatprep.subr.mxu0 0.0
    %323 = vmatpush1.msra.mxu0 %v87
    %324 = vmatprep.subr.mxu0 0.0
    %325 = vmatpush1.msra.mxu0 0.0
    %326 = vmatprep.subr.mxu0 0.0
    %327 = vmatpush1.msra.mxu0 0.0
    %328 = vmatprep.subr.mxu0 0.0
    %329 = vmatpush1.msra.mxu0 0.0
    %330 = vmatprep.subr.mxu0 0.0
    %331 = vmatpush1.msra.mxu0 0.0
    %332 = vmatprep.subr.mxu0 0.0
    %333 = vmatpush1.msra.mxu0 0.0
    %334 = vmatprep.subr.mxu0 0.0
    %335 = vmatpush1.msra.mxu0 0.0
    %336 = vmatprep.subr.mxu0 0.0
    %337 = vmatpush1.msra.mxu0 0.0
    %338 = vmatprep.subr.mxu0 0.0
    %339 = vmatpush1.msra.mxu0 0.0
    %340 = vmatprep.subr.mxu0 0.0
    %341 = vmatpush1.msra.mxu0 0.0
    %342 = vmatprep.subr.mxu0 0.0
    %343 = vmatpush1.msra.mxu0 0.0
    %344 = vmatprep.subr.mxu0 0.0
    %345 = vmatpush1.msra.mxu0 0.0
    %346 = vmatprep.subr.mxu0 0.0
    %347 = vmatpush1.msra.mxu0 0.0
    %348 = vmatprep.subr.mxu0 0.0
    %349 = vmatpush1.msra.mxu0 0.0
    %350 = vmatprep.subr.mxu0 0.0
    %351 = vmatpush1.msra.mxu0 0.0
    %352 = vmatprep.subr.mxu0 0.0
    %353 = vmatpush1.msra.mxu0 0.0
    %354 = vmatprep.subr.mxu0 0.0
    %355 = vmatpush1.msra.mxu0 0.0
    %356 = vmatprep.subr.mxu0 0.0
    %357 = vmatpush1.msra.mxu0 0.0
    %358 = vmatprep.subr.mxu0 0.0
    %359 = vmatpush1.msra.mxu0 0.0
    %360 = vmatprep.subr.mxu0 0.0
    %361 = vmatpush1.msra.mxu0 0.0
    %362 = vmatprep.subr.mxu0 0.0
    %363 = vmatpush1.msra.mxu0 0.0
    %364 = vmatprep.subr.mxu0 0.0
    %365 = vmatpush1.msra.mxu0 0.0
    %366 = vmatprep.subr.mxu0 0.0
    %367 = vmatpush1.msra.mxu0 0.0
    %368 = vmatprep.subr.mxu0 0.0
    %369 = vmatpush1.msra.mxu0 0.0
    %370 = vmatprep.subr.mxu0 0.0
    %371 = vmatpush1.msra.mxu0 0.0
    %372 = vmatprep.subr.mxu0 0.0
    %373 = vmatpush1.msra.mxu0 0.0
    %374 = vmatprep.subr.mxu0 0.0
    %375 = vmatpush1.msra.mxu0 0.0
    %376 = vmatprep.subr.mxu0 0.0
    %377 = vmatpush1.msra.mxu0 0.0
    %378 = vmatprep.subr.mxu0 0.0
    %379 = vmatpush1.msra.mxu0 0.0
    %380 = vmatprep.subr.mxu0 0.0
    %381 = vmatpush1.msra.mxu0 0.0
    %382 = vmatprep.subr.mxu0 0.0
    %383 = vmatpush1.msra.mxu0 0.0
    %384 = vmatprep.mubr.f32.mxu0 0.0
    %385 = vmatmul.mubr.f32.gmra.mrb[0].mxu0 %v309
    %v386 = vpop.f32.mrb[0].mxu0
    %v387 = vadd.f32 0.0, %v386
    %v388 = vpop.f32.mrb[0].mxu0
    %389 = vmatprep.mubr.f32.mxu0 0.0
    %390 = vmatmul.mubr.f32.gmra.mrb[0].mxu0 %v312
    %v391 = vpop.f32.mrb[0].mxu0
    %v392 = vadd.f32 0.0, %v391
    %v393 = vpop.f32.mrb[0].mxu0
    %394 = vmatprep.mubr.f32.mxu0 0.0
    %395 = vmatmul.mubr.f32.gmra.mrb[0].mxu0 %v315
    %v396 = vpop.f32.mrb[0].mxu0
    %v397 = vadd.f32 0.0, %v396
    %v398 = vpop.f32.mrb[0].mxu0
    %399 = vmatprep.mubr.f32.mxu0 0.0
    %400 = vmatmul.mubr.f32.gmra.mrb[0].mxu0 %v318
    %v401 = vpop.f32.mrb[0].mxu0
    %v402 = vadd.f32 0.0, %v401
    %v403 = vpop.f32.mrb[0].mxu0
    %404 = vdwg.mxu0
    %v405 = vadd.f32 %v272, %v387
    %v406 = vadd.f32 %v273, %v392
    %v407 = vadd.f32 %v274, %v397
    %v408 = vadd.f32 %v275, %v402
    %409 = vst.msk [vmem:[#allocation3] sm:$0xff] %vm93, %v405
    %410 = vst.msk [vmem:[#allocation3 + $0x8] sm:$0xff] %vm93, %v406
    %411 = vst.msk [vmem:[#allocation3 + $0x10] sm:$0xff] %vm93, %v407
    %412 = vst.msk [vmem:[#allocation3 + $0x18] sm:$0xff] %vm93, %v408
    // Predicated region
    $region22: #{tpu_custom_call.1} parent=1 // pred_check
      %p413 = pneg %p67
    $region23: #{tpu_custom_call.1} parent=1 // pred_check_branch
      %415 = sbr.rel (%p413) target = $region25
    $region24: #{tpu_custom_call.1} parent=1 // pred_region
      %v416 = vld [vmem:[#allocation2] sm:$0xff]
      %v417 = vld [vmem:[#allocation2 + $0x8] sm:$0xff]
      %v418 = vld [vmem:[#allocation2 + $0x10] sm:$0xff]
      %v419 = vld [vmem:[#allocation2 + $0x18] sm:$0xff]
      %420 = vst.msk [vmem:[#allocation12] sm:$0xff] %vm93, %v416
      %421 = vst.msk [vmem:[#allocation12 + $0x8] sm:$0xff] %vm93, %v417
      %422 = vst.msk [vmem:[#allocation12 + $0x10] sm:$0xff] %vm93, %v418
      %423 = vst.msk [vmem:[#allocation12 + $0x18] sm:$0xff] %vm93, %v419
      %v424 = vld [vmem:[#allocation3] sm:$0xff]
      %v425 = vld [vmem:[#allocation3 + $0x8] sm:$0xff]
      %v426 = vld [vmem:[#allocation3 + $0x10] sm:$0xff]
      %v427 = vld [vmem:[#allocation3 + $0x18] sm:$0xff]
      %428 = vst.msk [vmem:[#allocation13] sm:$0xff] %vm93, %v424
      %429 = vst.msk [vmem:[#allocation13 + $0x8] sm:$0xff] %vm93, %v425
      %430 = vst.msk [vmem:[#allocation13 + $0x10] sm:$0xff] %vm93, %v426
      %431 = vst.msk [vmem:[#allocation13 + $0x18] sm:$0xff] %vm93, %v427
      %v432 = vld [vmem:[#allocation4] sm:$0x1]
      %433 = vst.msk [vmem:[#allocation15] sm:$0x1] %vm104, %v432
      %v434 = vld [vmem:[#allocation5] sm:$0x1]
      %435 = vst.msk [vmem:[#allocation16] sm:$0x1] %vm104, %v434
      %v436 = vld [vmem:[#allocation6] sm:$0x1]
      %437 = vst.msk [vmem:[#allocation18] sm:$0x1] %vm104, %v436
    $region25: #{tpu_custom_call.1} parent=1 // pred_fallthru
      _
    // Predicated region
    $region26: #{tpu_custom_call.1} parent=1 // pred_check
      _
    $region27: #{tpu_custom_call.1} parent=1 // pred_check_branch
      %439 = sbr.rel (0) target = $region29
    $region28: #{tpu_custom_call.1} parent=1 // pred_region
      %s441 = ssub.s32 512, 512
      %442 = vsyncadd [#allocation9], %s441
      %s443 = sshll.u32 [#allocation12], 4
      %s444 = int_to_ptr.vmem [resolvable:$true] %s443
      %449 = dma.vmem_to_hbm [thread:$0]  %s444, 512, %s2, [#allocation9], 128, 128, 8
    $region29: #{tpu_custom_call.1} parent=1 // pred_fallthru
      _
    // Predicated region
    $region30: #{tpu_custom_call.1} parent=1 // pred_check
      _
    $region31: #{tpu_custom_call.1} parent=1 // pred_check_branch
      %451 = sbr.rel (0) target = $region33
    $region32: #{tpu_custom_call.1} parent=1 // pred_region
      %s453 = ssub.s32 512, 512
      %454 = vsyncadd [#allocation14], %s453
      %s455 = sshll.u32 [#allocation13], 4
      %s456 = int_to_ptr.vmem [resolvable:$true] %s455
      %461 = dma.vmem_to_hbm [thread:$0]  %s456, 512, %s3, [#allocation14], 128, 128, 8
    $region33: #{tpu_custom_call.1} parent=1 // pred_fallthru
      _
    // Predicated region
    $region34: #{tpu_custom_call.1} parent=1 // pred_check
      _
    $region35: #{tpu_custom_call.1} parent=1 // pred_check_branch
      %463 = sbr.rel (0) target = $region37
    $region36: #{tpu_custom_call.1} parent=1 // pred_region
      %s465 = ssub.s32 16, 16
      %466 = vsyncadd [#allocation14], %s465
      %s468 = sshll.u32 [#allocation15], 4
      %s469 = int_to_ptr.vmem [resolvable:$true] %s468
      %471 = dma.vmem_to_hbm [thread:$0]  %s469, 16, %s4, [#allocation14]
    $region37: #{tpu_custom_call.1} parent=1 // pred_fallthru
      _
    // Predicated region
    $region38: #{tpu_custom_call.1} parent=1 // pred_check
      _
    $region39: #{tpu_custom_call.1} parent=1 // pred_check_branch
      %473 = sbr.rel (0) target = $region41
    $region40: #{tpu_custom_call.1} parent=1 // pred_region
      %s475 = ssub.s32 16, 16
      %476 = vsyncadd [#allocation17], %s475
      %s478 = sshll.u32 [#allocation16], 4
      %s479 = int_to_ptr.vmem [resolvable:$true] %s478
      %481 = dma.vmem_to_hbm [thread:$0]  %s479, 16, %s5, [#allocation17]
    $region41: #{tpu_custom_call.1} parent=1 // pred_fallthru
      _
    // Predicated region
    $region42: #{tpu_custom_call.1} parent=1 // pred_check
      _
    $region43: #{tpu_custom_call.1} parent=1 // pred_check_branch
      %483 = sbr.rel (0) target = $region45
    $region44: #{tpu_custom_call.1} parent=1 // pred_region
      %s485 = ssub.s32 16, 16
      %486 = vsyncadd [#allocation17], %s485
      %s488 = sshll.u32 [#allocation18], 4
      %s489 = int_to_ptr.vmem [resolvable:$true] %s488
      %491 = dma.vmem_to_hbm [thread:$0]  %s489, 16, %s6, [#allocation17]
    $region45: #{tpu_custom_call.1} parent=1 // pred_fallthru
      _
    // Predicated region
    $region46: #{tpu_custom_call.1} parent=1 // pred_check
      _
    $region47: #{tpu_custom_call.1} parent=1 // pred_check_branch
      %493 = sbr.rel (0) target = $region49
    $region48: #{tpu_custom_call.1} parent=1 // pred_region
      %494 = dma.done [#allocation9], 512
    $region49: #{tpu_custom_call.1} parent=1 // pred_fallthru
      _
    // Predicated region
    $region50: #{tpu_custom_call.1} parent=1 // pred_check
      _
    $region51: #{tpu_custom_call.1} parent=1 // pred_check_branch
      %496 = sbr.rel (0) target = $region53
    $region52: #{tpu_custom_call.1} parent=1 // pred_region
      %497 = dma.done [#allocation14], 512
    $region53: #{tpu_custom_call.1} parent=1 // pred_fallthru
      _
    // Predicated region
    $region54: #{tpu_custom_call.1} parent=1 // pred_check
      _
    $region55: #{tpu_custom_call.1} parent=1 // pred_check_branch
      %499 = sbr.rel (0) target = $region57
    $region56: #{tpu_custom_call.1} parent=1 // pred_region
      %500 = dma.done [#allocation14], 16
    $region57: #{tpu_custom_call.1} parent=1 // pred_fallthru
      _
    // Predicated region
    $region58: #{tpu_custom_call.1} parent=1 // pred_check
      _
    $region59: #{tpu_custom_call.1} parent=1 // pred_check_branch
      %502 = sbr.rel (0) target = $region61
    $region60: #{tpu_custom_call.1} parent=1 // pred_region
      %503 = dma.done [#allocation17], 16
    $region61: #{tpu_custom_call.1} parent=1 // pred_fallthru
      _
    // Predicated region
    $region62: #{tpu_custom_call.1} parent=1 // pred_check
      _
    $region63: #{tpu_custom_call.1} parent=1 // pred_check_branch
      %505 = sbr.rel (0) target = $region65
    $region64: #{tpu_custom_call.1} parent=1 // pred_region
      %506 = dma.done [#allocation17], 16
    $region65: #{tpu_custom_call.1} parent=1 // pred_fallthru
      _
    %507 = vsyncpa [#allocation8], 1
    %508 = vsyncpa [#allocation11], 1
    %509 = vsyncpa [#allocation9], 1
    %510 = vsyncpa [#allocation14], 1
    %511 = vsyncpa [#allocation17], 1

</llo_original>
